<compile_context>
chip_gen: v6e
topology: v6e:2x2x1
jax: 0.10.0
libtpu: 0.0.40
codegen_flags: <defaults>
</compile_context>

<pallas_src>
import functools
import numpy as np
import jax
import jax.numpy as jnp
from jax.experimental import pallas as pl
from jax.experimental.pallas import tpu as pltpu


def _mha_kernel(*refs, heads, head_dim, seq_len, batch_block, has_mask,
                mask_fill, compute_dtype, approx):
    if has_mask:
        x_ref, m_ref, w_ref, wf_ref, bf_ref, o_ref = refs
    else:
        x_ref, w_ref, wf_ref, bf_ref, o_ref = refs
        m_ref = None

    H, D, L, B = heads, head_dim, seq_len, batch_block
    E = H * D
    cdt = compute_dtype

    # One fused projection for V, K, Q:  x @ [Wv_bd | (Wk·Wv)_bd | (Wq·Wv)_bd/√E].
    # The (E, 3E) weight is block-diagonal per head and pre-transposed host-side, so a
    # single MXU push with N = 3E replaces the previous serialized x->V->{K,Q} chain.
    x2 = x_ref[...]                                                       # (B*L, E) cdt
    vkq = jnp.dot(x2, w_ref[...], preferred_element_type=jnp.float32)     # (B*L, 3E) f32

    # Cast to the compute dtype ONCE; only cdt copies stay live across the head loop.
    vkq_c = vkq.astype(cdt)
    v3 = vkq_c[:, 0 * E:1 * E].reshape(B, L, E)
    k3 = vkq_c[:, 1 * E:2 * E].reshape(B, L, E)
    q3 = vkq_c[:, 2 * E:3 * E].reshape(B, L, E)      # already scaled by 1/sqrt(E)

    mask_all = m_ref[...] if has_mask else None      # bf16 0/1 keep-mask, tiny; load once

    head_outs = []
    for h in range(H):                               # static unroll; heads is small
        sl = slice(h * D, (h + 1) * D)
        qh = q3[:, :, sl]                            # (B, L, D)
        kh = k3[:, :, sl]
        vh = v3[:, :, sl]

        # scores (B, L, L): contraction on the last dims -> no explicit transpose.
        s = jnp.einsum('bqd,bkd->bqk', qh, kh, preferred_element_type=jnp.float32)
        if has_mask:
            hb = h if mask_all.shape[1] > 1 else 0
            keep = mask_all[:, hb]                   # (BBm, L, L), broadcasts over B
            # Exact PyTorch semantics: masked_fill(-1e20) happens BEFORE /sqrt(E) and the
            # scale is folded into Q, so the fill value is -1e20/sqrt(E).  Fully-masked
            # rows therefore give a uniform softmax, exactly like the reference.
            s = jnp.where(keep == 0, jnp.float32(mask_fill), s)

        # softmax over the key axis
        s = s - jnp.max(s, axis=-1, keepdims=True)
        p = jnp.exp(s)
        p = p * pl.reciprocal(jnp.sum(p, axis=-1, keepdims=True), approx=approx)

        head_outs.append(jnp.einsum('bqk,bkd->bqd', p.astype(cdt), vh,
                                    preferred_element_type=jnp.float32).astype(cdt))

    # Implicit concat over heads, then ONE (B*L, E) @ (E, E) fc matmul
    # (single K=E MXU push instead of H accumulated K=D pushes).
    o_cat = jnp.concatenate(head_outs, axis=-1).reshape(B * L, E)
    out = jnp.dot(o_cat, wf_ref[...], preferred_element_type=jnp.float32)
    o_ref[...] = (out + bf_ref[...]).astype(o_ref.dtype)


def _pick_batch_block(n, l, target_rows=256):
    """Largest divisor bb of n with bb*l <= target_rows rows per grid step, while keeping
    enough grid steps (>= min(4, n)) so the pipeline stays primed and the 'parallel' axis
    can feed both v7x TensorCores.  Falls back gracefully for small/awkward n, l."""
    for min_steps in (min(4, n), min(2, n), 1):
        best = 0
        for bb in range(1, n + 1):
            if n % bb == 0 and bb * l <= target_rows and n // bb >= min_steps:
                best = bb
        if best:
            return best
    return 1


def multi_head_attention(values, keys, queries, mask, params, *, heads,
                         compute_dtype=jnp.bfloat16, approx_reciprocal=True,
                         batch_block=None, target_rows=256):
    """Pallas implementation of MultiHeadAttention.forward."""
    N, L, E = values.shape
    assert keys.shape[1] == L and queries.shape[1] == L, "all seq lens must match"
    D = E // heads
    assert D * heads == E, "embed_size must be divisible by heads"

    if batch_block is None:
        batch_block = _pick_batch_block(N, L, target_rows)
    assert N % batch_block == 0
    BB = batch_block
    RB = BB * L                          # rows per grid step
    grid = (N // BB,)

    cdt = jnp.dtype(compute_dtype)
    inv_scale = 1.0 / (float(E) ** 0.5)
    mask_fill = -1e20 * inv_scale        # masked_fill happens BEFORE the /sqrt(E) scaling

    # ---- weights: composed + fused host-side (f32 HIGHEST compose, then one cast) ----
    wv = params["wv"].astype(jnp.float32)
    wk = params["wk"].astype(jnp.float32)
    wq = params["wq"].astype(jnp.float32)
    hp = jax.lax.Precision.HIGHEST
    # Per head: V = x Wv^T, K = V Wk^T = x (Wk·Wv)^T, Q = V Wq^T = x (Wq·Wv)^T.
    wkv = jnp.matmul(wk, wv, precision=hp)
    wqv = jnp.matmul(wq, wv, precision=hp)
    eye = jnp.eye(heads, dtype=jnp.float32)
    wv_bd = jnp.kron(eye, wv.T)
    wkv_bd = jnp.kron(eye, wkv.T)
    wqv_bd = jnp.kron(eye, wqv.T) * inv_scale                   # 1/sqrt(E) folded in
    w_cat = jnp.concatenate([wv_bd, wkv_bd, wqv_bd], axis=1).astype(cdt)   # (E, 3E)
    wf_t = params["wf"].T.astype(cdt)                                      # (E, E)
    bf2 = params["bf"].reshape(1, E).astype(jnp.float32)

    # Input DMA moves compute-dtype rows (bf16 fast path: half the input HBM traffic).
    x_flat = values.reshape(N * L, E).astype(cdt)

    has_mask = mask is not None
    in_specs = [pl.BlockSpec((RB, E), lambda n: (n, 0))]
    args = [x_flat]
    mask_block_bytes = 0
    if has_mask:
        m = jnp.asarray(mask)
        assert m.ndim <= 4, "mask rank must be <= 4"
        m4 = m.reshape((1,) * (4 - m.ndim) + m.shape)
        assert m4.shape[0] in (1, N) and m4.shape[1] in (1, heads), \
            "mask batch/head dims must be 1 or full"
        assert m4.shape[2] in (1, L) and m4.shape[3] in (1, L), \
            "mask last two dims must broadcast to (L, L)"
        Nb = 1 if m4.shape[0] == 1 else N
        Hb = 1 if m4.shape[1] == 1 else heads
        # Narrow 0/1 keep-mask (bf16): half the DMA/VMEM of a dense f32 bias; expanded
        # to the exact fill value in-kernel.  Only as large as the mask actually varies.
        m01 = jnp.broadcast_to(m4 != 0, (Nb, Hb, L, L)).astype(jnp.bfloat16)
        if Nb == N:
            mask_spec = pl.BlockSpec((BB, Hb, L, L), lambda n: (n, 0, 0, 0))
            mask_block_bytes = BB * Hb * L * L * 2
        else:
            mask_spec = pl.BlockSpec((1, Hb, L, L), lambda n: (0, 0, 0, 0))
            mask_block_bytes = Hb * L * L * 2
        in_specs.append(mask_spec)
        args.append(m01)

    in_specs += [
        pl.BlockSpec((E, 3 * E), lambda n: (0, 0)),   # [Wv | Wk·Wv | Wq·Wv/√E] block-diag
        pl.BlockSpec((E, E), lambda n: (0, 0)),       # Wf^T
        pl.BlockSpec((1, E), lambda n: (0, 0)),       # fc bias
    ]
    args += [w_cat, wf_t, bf2]

    # ---- explicit VMEM budget (v5e scoped default ~16 MiB; v7x 64 MiB physical) ----
    out_itemsize = jnp.dtype(values.dtype).itemsize
    weight_bytes = (3 * E * E + E * E) * cdt.itemsize + E * 4
    stream_bytes = 2 * (RB * E * cdt.itemsize + RB * E * out_itemsize + mask_block_bytes)
    interm_bytes = (RB * 3 * E * (4 + cdt.itemsize)
                    + RB * E * (4 + cdt.itemsize)
                    + 4 * BB * L * L * 4)
    vmem_need = stream_bytes + 2 * weight_bytes + interm_bytes
    vmem_limit = int(min(64 << 20, max(32 << 20, 2 * vmem_need)))
    # NOTE: at production E, additionally put pipeline_mode=pl.Buffered(1) on the three
    # constant weight specs to drop their double-buffer reservation (halves weight VMEM).

    kernel = functools.partial(
        _mha_kernel, heads=heads, head_dim=D, seq_len=L, batch_block=BB,
        has_mask=has_mask, mask_fill=mask_fill, compute_dtype=cdt,
        approx=approx_reciprocal)

    out_flat = pl.pallas_call(
        kernel,
        out_shape=jax.ShapeDtypeStruct((N * L, E), values.dtype),
        grid_spec=pltpu.PrefetchScalarGridSpec(
            num_scalar_prefetch=0,
            grid=grid,
            in_specs=in_specs,
            out_specs=pl.BlockSpec((RB, E), lambda n: (n, 0)),
        ),
        compiler_params=pltpu.CompilerParams(
            dimension_semantics=("parallel",),
            vmem_limit_bytes=vmem_limit),
    )(*args)

    return out_flat.reshape(N, L, E)


def reference_mha(values, keys, queries, mask, params, *, heads):
    """Pure-JAX replica of the PyTorch forward (including its quirks)."""
    N, L, E = values.shape
    D = E // heads
    x = values.reshape(N, L, heads, D)
    v = x @ params["wv"].T            # self.values(values)
    k = v @ params["wk"].T            # self.keys(values)    <- uses transformed values
    q = v @ params["wq"].T            # self.queries(values) <- uses transformed values
    e = jnp.einsum("nqhd,nkhd->nhqk", q, k)
    if mask is not None:
        e = jnp.where(mask == 0, -1e20, e)
    e = e / (float(E) ** 0.5)
    a = jax.nn.softmax(e, axis=3)
    out = jnp.einsum("nhql,nlhd->nqhd", a, v).reshape(N, L, E)
    return out @ params["wf"].T + params["bf"]


if __name__ == "__main__":
    embed_size, heads = 32, 4
    head_dim = embed_size // heads
    N, L = 2, 8

    key = jax.random.PRNGKey(0)
    kx, kk, kq, k1, k2, k3, k4, k5 = jax.random.split(key, 8)

    # deterministic "module parameters" (PyTorch Linear stores W as (out, in))
    def uni(k, shape, fan_in):
        b = 1.0 / np.sqrt(fan_in)
        return jax.random.uniform(k, shape, jnp.float32, -b, b)

    params = {
        "wv": uni(k1, (head_dim, head_dim), head_dim),
        "wk": uni(k2, (head_dim, head_dim), head_dim),
        "wq": uni(k3, (head_dim, head_dim), head_dim),
        "wf": uni(k4, (embed_size, embed_size), embed_size),
        "bf": uni(k5, (embed_size,), embed_size),
    }

    values = jax.random.normal(kx, (N, L, embed_size), jnp.float32)
    keys_in = jax.random.normal(kk, (N, L, embed_size), jnp.float32)
    queries_in = jax.random.normal(kq, (N, L, embed_size), jnp.float32)

    causal = jnp.tril(jnp.ones((L, L), jnp.int32))   # 0/1 mask (broadcast over N, heads)

    for mask in (None, causal):
        ref = reference_mha(values, keys_in, queries_in, mask, params, heads=heads)

        # Exact path: f32 MXU operands + exact reciprocal -> tight tolerance.
        out = multi_head_attention(values, keys_in, queries_in, mask, params,
                                   heads=heads, compute_dtype=jnp.float32,
                                   approx_reciprocal=False)
        out = jax.block_until_ready(out)
        np.testing.assert_allclose(np.asarray(out), np.asarray(ref),
                                   rtol=1e-4, atol=1e-4)

        # Fast path (default): bf16 MXU operands, f32 accumulation, EUP approx recip.
        out_fast = multi_head_attention(values, keys_in, queries_in, mask, params,
                                        heads=heads)
        out_fast = jax.block_until_ready(out_fast)
        np.testing.assert_allclose(np.asarray(out_fast), np.asarray(ref),
                                   rtol=2e-2, atol=2e-2)

    print("KERNEL_OK")
</pallas_src>

<mosaic_0001>
module attributes {stable_mosaic.version = 11 : i64} {
  func.func @_mha_kernel(%arg0: i32, %arg1: memref<8x32xf32, #tpu.memory_space<vmem>>, %arg2: memref<32x96xf32, #tpu.memory_space<vmem>>, %arg3: memref<32x32xf32, #tpu.memory_space<vmem>>, %arg4: memref<1x32xf32, #tpu.memory_space<vmem>>, %arg5: memref<8x32xf32, #tpu.memory_space<vmem>>) attributes {dimension_semantics = [#tpu.dimension_semantics<parallel>], iteration_bounds = array<i64: 2>, scalar_prefetch = 0 : i64, scratch_operands = 0 : i64, tpu.core_type = #tpu.core_type<tc>, window_params = [{transform_indices = @transform_0, window_bounds = array<i64: 8, 32>}, {pipeline_mode = #tpu.pipeline_mode<synchronous>, transform_indices = @transform_1, window_bounds = array<i64: 32, 96>}, {pipeline_mode = #tpu.pipeline_mode<synchronous>, transform_indices = @transform_2, window_bounds = array<i64: 32, 32>}, {pipeline_mode = #tpu.pipeline_mode<synchronous>, transform_indices = @transform_3, window_bounds = array<i64: 1, 32>}, {transform_indices = @transform_4, window_bounds = array<i64: 8, 32>}]} {
    %c0 = arith.constant 0 : index
    %c0_0 = arith.constant 0 : index
    %0 = vector.load %arg1[%c0, %c0_0] : memref<8x32xf32, #tpu.memory_space<vmem>>, vector<8x32xf32>
    %c0_1 = arith.constant 0 : index
    %c0_2 = arith.constant 0 : index
    %1 = vector.load %arg2[%c0_1, %c0_2] : memref<32x96xf32, #tpu.memory_space<vmem>>, vector<32x96xf32>
    %cst = arith.constant dense<0.000000e+00> : vector<8x96xf32>
    %2 = tpu.matmul %0, %1, %cst {dimension_numbers = #tpu.dot_dimension_numbers<[1], [0], [0], [1], [0, 0, 1, 1], [], []>} : vector<8x32xf32>, vector<32x96xf32>, vector<8x96xf32> -> vector<8x96xf32>
    %3 = vector.extract_strided_slice %2 {offsets = [0, 0], sizes = [8, 32], strides = [1, 1]} : vector<8x96xf32> to vector<8x32xf32>
    %4 = vector.shape_cast %3 : vector<8x32xf32> to vector<1x8x32xf32>
    %5 = vector.extract_strided_slice %2 {offsets = [0, 32], sizes = [8, 32], strides = [1, 1]} : vector<8x96xf32> to vector<8x32xf32>
    %6 = vector.shape_cast %5 : vector<8x32xf32> to vector<1x8x32xf32>
    %7 = vector.extract_strided_slice %2 {offsets = [0, 64], sizes = [8, 32], strides = [1, 1]} : vector<8x96xf32> to vector<8x32xf32>
    %8 = vector.shape_cast %7 : vector<8x32xf32> to vector<1x8x32xf32>
    %9 = vector.extract_strided_slice %8 {offsets = [0, 0, 0], sizes = [1, 8, 8], strides = [1, 1, 1]} : vector<1x8x32xf32> to vector<1x8x8xf32>
    %10 = vector.extract_strided_slice %6 {offsets = [0, 0, 0], sizes = [1, 8, 8], strides = [1, 1, 1]} : vector<1x8x32xf32> to vector<1x8x8xf32>
    %11 = vector.extract_strided_slice %4 {offsets = [0, 0, 0], sizes = [1, 8, 8], strides = [1, 1, 1]} : vector<1x8x32xf32> to vector<1x8x8xf32>
    "tpu.trace_start"() <{level = 10 : i32, message = "bqd,bkd->bqk"}> : () -> ()
    %cst_3 = arith.constant dense<0.000000e+00> : vector<1x8x8xf32>
    %12 = tpu.matmul %9, %10, %cst_3 {dimension_numbers = #tpu.dot_dimension_numbers<[2], [2], [1], [1], [0, 0, 0, 1, 1, 1], [0], [0]>} : vector<1x8x8xf32>, vector<1x8x8xf32>, vector<1x8x8xf32> -> vector<1x8x8xf32>
    "tpu.trace_stop"() : () -> ()
    %cst_4 = arith.constant dense<0xFF800000> : vector<1x8xf32>
    %13 = vector.multi_reduction <maximumf>, %12, %cst_4 [2] : vector<1x8x8xf32> to vector<1x8xf32>
    %14 = vector.shape_cast %13 : vector<1x8xf32> to vector<1x8x1xf32>
    %15 = vector.broadcast %14 : vector<1x8x1xf32> to vector<1x8x8xf32>
    %16 = arith.subf %12, %15 : vector<1x8x8xf32>
    %17 = math.exp %16 : vector<1x8x8xf32>
    %cst_5 = arith.constant dense<0.000000e+00> : vector<1x8xf32>
    %18 = vector.multi_reduction <add>, %17, %cst_5 [2] : vector<1x8x8xf32> to vector<1x8xf32>
    %19 = vector.shape_cast %18 : vector<1x8xf32> to vector<1x8x1xf32>
    %20 = tpu.reciprocal %19 : vector<1x8x1xf32> -> vector<1x8x1xf32>
    %21 = vector.broadcast %20 : vector<1x8x1xf32> to vector<1x8x8xf32>
    %22 = arith.mulf %17, %21 : vector<1x8x8xf32>
    "tpu.trace_start"() <{level = 10 : i32, message = "bqk,bkd->bqd"}> : () -> ()
    %cst_6 = arith.constant dense<0.000000e+00> : vector<1x8x8xf32>
    %23 = tpu.matmul %22, %11, %cst_6 {dimension_numbers = #tpu.dot_dimension_numbers<[2], [1], [1], [2], [0, 0, 0, 1, 1, 2], [0], [0]>} : vector<1x8x8xf32>, vector<1x8x8xf32>, vector<1x8x8xf32> -> vector<1x8x8xf32>
    "tpu.trace_stop"() : () -> ()
    %24 = vector.extract_strided_slice %8 {offsets = [0, 0, 8], sizes = [1, 8, 8], strides = [1, 1, 1]} : vector<1x8x32xf32> to vector<1x8x8xf32>
    %25 = vector.extract_strided_slice %6 {offsets = [0, 0, 8], sizes = [1, 8, 8], strides = [1, 1, 1]} : vector<1x8x32xf32> to vector<1x8x8xf32>
    %26 = vector.extract_strided_slice %4 {offsets = [0, 0, 8], sizes = [1, 8, 8], strides = [1, 1, 1]} : vector<1x8x32xf32> to vector<1x8x8xf32>
    "tpu.trace_start"() <{level = 10 : i32, message = "bqd,bkd->bqk"}> : () -> ()
    %cst_7 = arith.constant dense<0.000000e+00> : vector<1x8x8xf32>
    %27 = tpu.matmul %24, %25, %cst_7 {dimension_numbers = #tpu.dot_dimension_numbers<[2], [2], [1], [1], [0, 0, 0, 1, 1, 1], [0], [0]>} : vector<1x8x8xf32>, vector<1x8x8xf32>, vector<1x8x8xf32> -> vector<1x8x8xf32>
    "tpu.trace_stop"() : () -> ()
    %cst_8 = arith.constant dense<0xFF800000> : vector<1x8xf32>
    %28 = vector.multi_reduction <maximumf>, %27, %cst_8 [2] : vector<1x8x8xf32> to vector<1x8xf32>
    %29 = vector.shape_cast %28 : vector<1x8xf32> to vector<1x8x1xf32>
    %30 = vector.broadcast %29 : vector<1x8x1xf32> to vector<1x8x8xf32>
    %31 = arith.subf %27, %30 : vector<1x8x8xf32>
    %32 = math.exp %31 : vector<1x8x8xf32>
    %cst_9 = arith.constant dense<0.000000e+00> : vector<1x8xf32>
    %33 = vector.multi_reduction <add>, %32, %cst_9 [2] : vector<1x8x8xf32> to vector<1x8xf32>
    %34 = vector.shape_cast %33 : vector<1x8xf32> to vector<1x8x1xf32>
    %35 = tpu.reciprocal %34 : vector<1x8x1xf32> -> vector<1x8x1xf32>
    %36 = vector.broadcast %35 : vector<1x8x1xf32> to vector<1x8x8xf32>
    %37 = arith.mulf %32, %36 : vector<1x8x8xf32>
    "tpu.trace_start"() <{level = 10 : i32, message = "bqk,bkd->bqd"}> : () -> ()
    %cst_10 = arith.constant dense<0.000000e+00> : vector<1x8x8xf32>
    %38 = tpu.matmul %37, %26, %cst_10 {dimension_numbers = #tpu.dot_dimension_numbers<[2], [1], [1], [2], [0, 0, 0, 1, 1, 2], [0], [0]>} : vector<1x8x8xf32>, vector<1x8x8xf32>, vector<1x8x8xf32> -> vector<1x8x8xf32>
    "tpu.trace_stop"() : () -> ()
    %39 = vector.extract_strided_slice %8 {offsets = [0, 0, 16], sizes = [1, 8, 8], strides = [1, 1, 1]} : vector<1x8x32xf32> to vector<1x8x8xf32>
    %40 = vector.extract_strided_slice %6 {offsets = [0, 0, 16], sizes = [1, 8, 8], strides = [1, 1, 1]} : vector<1x8x32xf32> to vector<1x8x8xf32>
    %41 = vector.extract_strided_slice %4 {offsets = [0, 0, 16], sizes = [1, 8, 8], strides = [1, 1, 1]} : vector<1x8x32xf32> to vector<1x8x8xf32>
    "tpu.trace_start"() <{level = 10 : i32, message = "bqd,bkd->bqk"}> : () -> ()
    %cst_11 = arith.constant dense<0.000000e+00> : vector<1x8x8xf32>
    %42 = tpu.matmul %39, %40, %cst_11 {dimension_numbers = #tpu.dot_dimension_numbers<[2], [2], [1], [1], [0, 0, 0, 1, 1, 1], [0], [0]>} : vector<1x8x8xf32>, vector<1x8x8xf32>, vector<1x8x8xf32> -> vector<1x8x8xf32>
    "tpu.trace_stop"() : () -> ()
    %cst_12 = arith.constant dense<0xFF800000> : vector<1x8xf32>
    %43 = vector.multi_reduction <maximumf>, %42, %cst_12 [2] : vector<1x8x8xf32> to vector<1x8xf32>
    %44 = vector.shape_cast %43 : vector<1x8xf32> to vector<1x8x1xf32>
    %45 = vector.broadcast %44 : vector<1x8x1xf32> to vector<1x8x8xf32>
    %46 = arith.subf %42, %45 : vector<1x8x8xf32>
    %47 = math.exp %46 : vector<1x8x8xf32>
    %cst_13 = arith.constant dense<0.000000e+00> : vector<1x8xf32>
    %48 = vector.multi_reduction <add>, %47, %cst_13 [2] : vector<1x8x8xf32> to vector<1x8xf32>
    %49 = vector.shape_cast %48 : vector<1x8xf32> to vector<1x8x1xf32>
    %50 = tpu.reciprocal %49 : vector<1x8x1xf32> -> vector<1x8x1xf32>
    %51 = vector.broadcast %50 : vector<1x8x1xf32> to vector<1x8x8xf32>
    %52 = arith.mulf %47, %51 : vector<1x8x8xf32>
    "tpu.trace_start"() <{level = 10 : i32, message = "bqk,bkd->bqd"}> : () -> ()
    %cst_14 = arith.constant dense<0.000000e+00> : vector<1x8x8xf32>
    %53 = tpu.matmul %52, %41, %cst_14 {dimension_numbers = #tpu.dot_dimension_numbers<[2], [1], [1], [2], [0, 0, 0, 1, 1, 2], [0], [0]>} : vector<1x8x8xf32>, vector<1x8x8xf32>, vector<1x8x8xf32> -> vector<1x8x8xf32>
    "tpu.trace_stop"() : () -> ()
    %54 = vector.extract_strided_slice %8 {offsets = [0, 0, 24], sizes = [1, 8, 8], strides = [1, 1, 1]} : vector<1x8x32xf32> to vector<1x8x8xf32>
    %55 = vector.extract_strided_slice %6 {offsets = [0, 0, 24], sizes = [1, 8, 8], strides = [1, 1, 1]} : vector<1x8x32xf32> to vector<1x8x8xf32>
    %56 = vector.extract_strided_slice %4 {offsets = [0, 0, 24], sizes = [1, 8, 8], strides = [1, 1, 1]} : vector<1x8x32xf32> to vector<1x8x8xf32>
    "tpu.trace_start"() <{level = 10 : i32, message = "bqd,bkd->bqk"}> : () -> ()
    %cst_15 = arith.constant dense<0.000000e+00> : vector<1x8x8xf32>
    %57 = tpu.matmul %54, %55, %cst_15 {dimension_numbers = #tpu.dot_dimension_numbers<[2], [2], [1], [1], [0, 0, 0, 1, 1, 1], [0], [0]>} : vector<1x8x8xf32>, vector<1x8x8xf32>, vector<1x8x8xf32> -> vector<1x8x8xf32>
    "tpu.trace_stop"() : () -> ()
    %cst_16 = arith.constant dense<0xFF800000> : vector<1x8xf32>
    %58 = vector.multi_reduction <maximumf>, %57, %cst_16 [2] : vector<1x8x8xf32> to vector<1x8xf32>
    %59 = vector.shape_cast %58 : vector<1x8xf32> to vector<1x8x1xf32>
    %60 = vector.broadcast %59 : vector<1x8x1xf32> to vector<1x8x8xf32>
    %61 = arith.subf %57, %60 : vector<1x8x8xf32>
    %62 = math.exp %61 : vector<1x8x8xf32>
    %cst_17 = arith.constant dense<0.000000e+00> : vector<1x8xf32>
    %63 = vector.multi_reduction <add>, %62, %cst_17 [2] : vector<1x8x8xf32> to vector<1x8xf32>
    %64 = vector.shape_cast %63 : vector<1x8xf32> to vector<1x8x1xf32>
    %65 = tpu.reciprocal %64 : vector<1x8x1xf32> -> vector<1x8x1xf32>
    %66 = vector.broadcast %65 : vector<1x8x1xf32> to vector<1x8x8xf32>
    %67 = arith.mulf %62, %66 : vector<1x8x8xf32>
    "tpu.trace_start"() <{level = 10 : i32, message = "bqk,bkd->bqd"}> : () -> ()
    %cst_18 = arith.constant dense<0.000000e+00> : vector<1x8x8xf32>
    %68 = tpu.matmul %67, %56, %cst_18 {dimension_numbers = #tpu.dot_dimension_numbers<[2], [1], [1], [2], [0, 0, 0, 1, 1, 2], [0], [0]>} : vector<1x8x8xf32>, vector<1x8x8xf32>, vector<1x8x8xf32> -> vector<1x8x8xf32>
    "tpu.trace_stop"() : () -> ()
    %69 = tpu.concatenate %23, %38, %53, %68 in 2 : vector<1x8x8xf32>, vector<1x8x8xf32>, vector<1x8x8xf32>, vector<1x8x8xf32> -> vector<1x8x32xf32>
    %70 = vector.shape_cast %69 : vector<1x8x32xf32> to vector<8x32xf32>
    %c0_19 = arith.constant 0 : index
    %c0_20 = arith.constant 0 : index
    %71 = vector.load %arg3[%c0_19, %c0_20] : memref<32x32xf32, #tpu.memory_space<vmem>>, vector<32x32xf32>
    %cst_21 = arith.constant dense<0.000000e+00> : vector<8x32xf32>
    %72 = tpu.matmul %70, %71, %cst_21 {dimension_numbers = #tpu.dot_dimension_numbers<[1], [0], [0], [1], [0, 0, 1, 1], [], []>} : vector<8x32xf32>, vector<32x32xf32>, vector<8x32xf32> -> vector<8x32xf32>
    %c0_22 = arith.constant 0 : index
    %c0_23 = arith.constant 0 : index
    %73 = vector.load %arg4[%c0_22, %c0_23] : memref<1x32xf32, #tpu.memory_space<vmem>>, vector<1x32xf32>
    %74 = vector.broadcast %73 : vector<1x32xf32> to vector<8x32xf32>
    %75 = arith.addf %72, %74 : vector<8x32xf32>
    %c0_24 = arith.constant 0 : index
    %c0_25 = arith.constant 0 : index
    %76 = vector.load %arg5[%c0_24, %c0_25] : memref<8x32xf32, #tpu.memory_space<vmem>>, vector<8x32xf32>
    tpu.vector_store %arg5[%c0_24, %c0_25], %75 {strides = array<i32>} : memref<8x32xf32, #tpu.memory_space<vmem>>, vector<8x32xf32>,
    return
  }
  func.func @transform_0(%arg0: i32) -> (i32, i32) {
    %c0_i32 = arith.constant 0 : i32
    %c0_i32_0 = arith.constant 0 : i32
    return %arg0, %c0_i32 : i32, i32
  }
  func.func @transform_1(%arg0: i32) -> (i32, i32) {
    %c0_i32 = arith.constant 0 : i32
    %c0_i32_0 = arith.constant 0 : i32
    %c0_i32_1 = arith.constant 0 : i32
    return %c0_i32, %c0_i32_0 : i32, i32
  }
  func.func @transform_2(%arg0: i32) -> (i32, i32) {
    %c0_i32 = arith.constant 0 : i32
    %c0_i32_0 = arith.constant 0 : i32
    %c0_i32_1 = arith.constant 0 : i32
    return %c0_i32, %c0_i32_0 : i32, i32
  }
  func.func @transform_3(%arg0: i32) -> (i32, i32) {
    %c0_i32 = arith.constant 0 : i32
    %c0_i32_0 = arith.constant 0 : i32
    %c0_i32_1 = arith.constant 0 : i32
    return %c0_i32, %c0_i32_0 : i32, i32
  }
  func.func @transform_4(%arg0: i32) -> (i32, i32) {
    %c0_i32 = arith.constant 0 : i32
    %c0_i32_0 = arith.constant 0 : i32
    return %arg0, %c0_i32 : i32, i32
  }
}

</mosaic_0001>

<llo_original>
// kernel: tpu_custom_call.1
$region0: #{tpu_custom_call.1}
  #allocation0 [shape = 'u32[]', space=smem, size = 0x4, offset = 0x4, fixed_abs, tag = 'smem constant byte address 0x4 - core index']
  #allocation1 [shape = 'u32[144,128]{1,0:T(1,128)}', space=vmem, size = 0x12000, scoped, tag = 'internal scratch']
  %s0 = inlined_call_operand.hbm [shape: f32[16,32], index: 0, kind: input, shape index: {}]
  %s1 = inlined_call_operand.hbm [shape: f32[32,96], index: 1, kind: input, shape index: {}]
  %s2 = inlined_call_operand.hbm [shape: f32[32,32], index: 2, kind: input, shape index: {}]
  %s3 = inlined_call_operand.vmem [shape: f32[1,32], index: 3, kind: input, shape index: {}]
  %s4 = inlined_call_operand.hbm [shape: f32[16,32], index: 4, kind: output, shape index: {}]
  %s5 = sld [smem:[#allocation0]]
  $region61: #{tpu_custom_call.1} parent=0
    _
  %s7 = ssub.s32 1, %s5
  %s8 = scalar_select 0, %s7, %s5
  $region1: #{tpu_custom_call.1} parent=0
    #allocation2 [shape = 'u8[8192]{0}', space=vmem, size = 0x2000, scoped, tag = 'input window, operand 0']
    #allocation3 [shape = 's32[2]{0}', space=sflag, size = 0x8, scoped, tag = 'scoped memory for tpu_custom_call.1']
    #allocation4 [shape = 's32[2]{0}', space=sflag, size = 0x8, scoped, tag = 'scoped memory for tpu_custom_call.1']
    #allocation5 [shape = 'u8[16384]{0}', space=vmem, size = 0x4000, scoped, tag = 'input window, operand 1, single buffered']
    #allocation6 [shape = 's32[1]{0}', space=sflag, size = 0x4, scoped, tag = 'scoped memory for tpu_custom_call.1']
    #allocation7 [shape = 'u8[16384]{0}', space=vmem, size = 0x4000, scoped, tag = 'input window, operand 2, single buffered']
    #allocation8 [shape = 'u8[8192]{0}', space=vmem, size = 0x2000, scoped, tag = 'output window, operand 0']
    %9 = vsyncpa [#allocation3], 0
    %s10 = scalar_lea.sflag [#allocation3], 1
    %11 = vsyncpa %s10, 0
    %12 = vsyncpa [#allocation6], 0
    %13 = vsyncpa [#allocation4], 0
    %s14 = scalar_lea.sflag [#allocation4], 1
    %15 = vsyncpa %s14, 0
    loop: start=0, step=1, limit=4
    $region2: #{tpu_custom_call.1} parent=1 // loop_pre_header
      _
    $region3: #{tpu_custom_call.1} parent=1 // loop_header
      %s17 = sphi 0, %s21
      %p18 = scmp.ge.s32.totalorder %s17, 4
      %s27 = sphi 0, %s29
      %s30 = sphi 0, %s27
      %s31 = sphi 0, %s30
      %s47 = sphi 0, %s31
      %s51 = sphi 0, %s51
      %s53 = sphi 0, %s51
      %s54 = sphi 0, %s53
      %s68 = sphi 0, %s54
      %s72 = sphi 0, %s72
      %s74 = sphi 0, %s72
      %s75 = sphi 0, %s74
      %s89 = sphi 0, %s75
      %s93 = sphi 0, %s93
      %s95 = sphi 0, %s93
      %s96 = sphi 0, %s95
      %s110 = sphi 0, %s96
      %s116 = sphi 0, %s118
      %s119 = sphi 0, %s116
      %s120 = sphi 0, %s119
      %s136 = sphi 0, %s120
    $region4: #{tpu_custom_call.1} parent=1 // loop_header_branch
      %20 = sbr.rel (%p18) target = $region8
    $region5: #{tpu_custom_call.1} parent=1 // loop_body
      %s22 = ssub.s32 %s17, 1
      %s23 = ssub.s32 %s17, 2
      %s24 = sadd.s32 %s17, 1
      %s25 = ssub.s32 %s17, %s24
      %p26 = scmp.eq.s32.totalorder %s25, 0
      %s28 = sadd.s32 %s27, 1
      %s29 = scalar_select %p26, %s27, %s28
      %p32 = pneg %p26
      %p33 = scmp.eq.s32.totalorder %s17, 1
      %p34 = por %p32, %p33
      %p35 = scmp.ne.s32.totalorder %s27, %s30
      %p36 = scmp.eq.s32.totalorder %s17, 0
      %p37 = por %p35, %p36
      %p38 = scmp.ne.s32.totalorder %s27, %s30
      %p39 = scmp.eq.s32.totalorder %s22, 1
      %p40 = por %p38, %p39
      %p41 = scmp.ne.s32.totalorder %s30, %s31
      %p42 = scmp.eq.s32.totalorder %s22, 0
      %p43 = por %p41, %p42
      %p44 = scmp.ne.s32.totalorder %s30, %s31
      %p45 = scmp.eq.s32.totalorder %s23, 1
      %p46 = por %p44, %p45
      %p48 = scmp.ne.s32.totalorder %s31, %s47
      %p49 = scmp.eq.s32.totalorder %s23, 0
      %p50 = por %p48, %p49
      %s52 = sadd.s32 %s51, 1
      %p55 = scmp.eq.s32.totalorder %s17, 1
      %p56 = scmp.ne.s32.totalorder %s51, %s53
      %p57 = scmp.eq.s32.totalorder %s17, 0
      %p58 = por %p56, %p57
      %p59 = scmp.ne.s32.totalorder %s51, %s53
      %p60 = scmp.eq.s32.totalorder %s22, 1
      %p61 = por %p59, %p60
      %p62 = scmp.ne.s32.totalorder %s53, %s54
      %p63 = scmp.eq.s32.totalorder %s22, 0
      %p64 = por %p62, %p63
      %p65 = scmp.ne.s32.totalorder %s53, %s54
      %p66 = scmp.eq.s32.totalorder %s23, 1
      %p67 = por %p65, %p66
      %p69 = scmp.ne.s32.totalorder %s54, %s68
      %p70 = scmp.eq.s32.totalorder %s23, 0
      %p71 = por %p69, %p70
      %s73 = sadd.s32 %s72, 1
      %p76 = scmp.eq.s32.totalorder %s17, 1
      %p77 = scmp.ne.s32.totalorder %s72, %s74
      %p78 = scmp.eq.s32.totalorder %s17, 0
      %p79 = por %p77, %p78
      %p80 = scmp.ne.s32.totalorder %s72, %s74
      %p81 = scmp.eq.s32.totalorder %s22, 1
      %p82 = por %p80, %p81
      %p83 = scmp.ne.s32.totalorder %s74, %s75
      %p84 = scmp.eq.s32.totalorder %s22, 0
      %p85 = por %p83, %p84
      %p86 = scmp.ne.s32.totalorder %s74, %s75
      %p87 = scmp.eq.s32.totalorder %s23, 1
      %p88 = por %p86, %p87
      %p90 = scmp.ne.s32.totalorder %s75, %s89
      %p91 = scmp.eq.s32.totalorder %s23, 0
      %p92 = por %p90, %p91
      %s94 = sadd.s32 %s93, 1
      %p97 = scmp.eq.s32.totalorder %s17, 1
      %p98 = scmp.ne.s32.totalorder %s93, %s95
      %p99 = scmp.eq.s32.totalorder %s17, 0
      %p100 = por %p98, %p99
      %p101 = scmp.ne.s32.totalorder %s93, %s95
      %p102 = scmp.eq.s32.totalorder %s22, 1
      %p103 = por %p101, %p102
      %p104 = scmp.ne.s32.totalorder %s95, %s96
      %p105 = scmp.eq.s32.totalorder %s22, 0
      %p106 = por %p104, %p105
      %p107 = scmp.ne.s32.totalorder %s95, %s96
      %p108 = scmp.eq.s32.totalorder %s23, 1
      %p109 = por %p107, %p108
      %p111 = scmp.ne.s32.totalorder %s96, %s110
      %p112 = scmp.eq.s32.totalorder %s23, 0
      %p113 = por %p111, %p112
      %s114 = ssub.s32 %s17, %s24
      %p115 = scmp.eq.s32.totalorder %s114, 0
      %s117 = sadd.s32 %s116, 1
      %s118 = scalar_select %p115, %s116, %s117
      %p121 = pneg %p115
      %p122 = scmp.eq.s32.totalorder %s17, 1
      %p123 = por %p121, %p122
      %p124 = scmp.ne.s32.totalorder %s116, %s119
      %p125 = scmp.eq.s32.totalorder %s17, 0
      %p126 = por %p124, %p125
      %p127 = scmp.ne.s32.totalorder %s116, %s119
      %p128 = scmp.eq.s32.totalorder %s22, 1
      %p129 = por %p127, %p128
      %p130 = scmp.ne.s32.totalorder %s119, %s120
      %p131 = scmp.eq.s32.totalorder %s22, 0
      %p132 = por %p130, %p131
      %p133 = scmp.ne.s32.totalorder %s119, %s120
      %p134 = scmp.eq.s32.totalorder %s23, 1
      %p135 = por %p133, %p134
      %p137 = scmp.ne.s32.totalorder %s120, %s136
      %p138 = scmp.eq.s32.totalorder %s23, 0
      %p139 = por %p137, %p138
      %p140 = scmp.le.s32.totalorder 1, %s17
      %p141 = scmp.lt.s32.totalorder %s17, 3
      %p142 = pnand %p140, %p141
      %p143 = pneg %p142
      // Predicated region
      $region9: #{tpu_custom_call.1} parent=5 // pred_check
        _
      $region10: #{tpu_custom_call.1} parent=5 // pred_check_branch
        %145 = sbr.rel (%p142) target = $region12
      $region11: #{tpu_custom_call.1} parent=5 // pred_region
        %s146 = ssub.s32 %s17, 1
        // Predicated region
        $region13: #{tpu_custom_call.1} parent=11 // pred_check
          %p147 = pneg %p64
        $region14: #{tpu_custom_call.1} parent=11 // pred_check_branch
          %149 = sbr.rel (%p147) target = $region16
        $region15: #{tpu_custom_call.1} parent=11 // pred_region
          %s151 = ssub.s32 512, 512
          %152 = vsyncadd [#allocation6], %s151
          %s153 = sshll.u32 [#allocation5], 4
          %s154 = int_to_ptr.vmem [resolvable:$true] %s153
          %159 = dma.hbm_to_vmem [thread:$0]  %s1, 512, %s154, [#allocation6], 128, 128, 8
        $region16: #{tpu_custom_call.1} parent=11 // pred_fallthru
          _
        // Predicated region
        $region17: #{tpu_custom_call.1} parent=11 // pred_check
          %p160 = pneg %p85
        $region18: #{tpu_custom_call.1} parent=11 // pred_check_branch
          %162 = sbr.rel (%p160) target = $region20
        $region19: #{tpu_custom_call.1} parent=11 // pred_region
          %s164 = ssub.s32 512, 512
          %165 = vsyncadd [#allocation6], %s164
          %s166 = sshll.u32 [#allocation7], 4
          %s167 = int_to_ptr.vmem [resolvable:$true] %s166
          %172 = dma.hbm_to_vmem [thread:$0]  %s2, 512, %s167, [#allocation6], 128, 128, 8
        $region20: #{tpu_custom_call.1} parent=11 // pred_fallthru
          _
        // Predicated region
        $region21: #{tpu_custom_call.1} parent=11 // pred_check
          %p173 = pneg %p106
        $region22: #{tpu_custom_call.1} parent=11 // pred_check_branch
          %175 = sbr.rel (%p173) target = $region24
        $region23: #{tpu_custom_call.1} parent=11 // pred_region
          _
        $region24: #{tpu_custom_call.1} parent=11 // pred_fallthru
          _
      $region12: #{tpu_custom_call.1} parent=5 // pred_fallthru
        _
      %p176 = scmp.lt.s32.totalorder %s17, 2
      // Predicated region
      $region25: #{tpu_custom_call.1} parent=5 // pred_check
        %p177 = pneg %p176
      $region26: #{tpu_custom_call.1} parent=5 // pred_check_branch
        %179 = sbr.rel (%p177) target = $region28
      $region27: #{tpu_custom_call.1} parent=5 // pred_region
        // Predicated region
        $region29: #{tpu_custom_call.1} parent=27 // pred_check
          %p180 = pneg %p37
        $region30: #{tpu_custom_call.1} parent=27 // pred_check_branch
          %182 = sbr.rel (%p180) target = $region32
        $region31: #{tpu_custom_call.1} parent=27 // pred_region
          %s183 = sand.u32 %s27, 1
          %s184 = scalar_lea.sflag [#allocation3], %s183
          %s185 = sand.u32 %s27, 1
          %s186 = smul.addr %s185, 8
          %s187 = scalar_lea.vmem [#allocation2], %s186
          %s189 = ssub.s32 128, 128
          %190 = vsyncadd %s184, %s189
          %s191 = smul.addr %s17, 128
          %s192 = scalar_lea.hbm %s0, %s191
          %s194 = sshll.u32 %s187, 4
          %s195 = int_to_ptr.vmem [resolvable:$true] %s194
          %197 = dma.hbm_to_vmem [thread:$0]  %s192, 128, %s195, %s184
        $region32: #{tpu_custom_call.1} parent=27 // pred_fallthru
          _
      $region28: #{tpu_custom_call.1} parent=5 // pred_fallthru
        _
      %p198 = scmp.le.s32.totalorder 1, %s17
      %p199 = scmp.lt.s32.totalorder %s17, 3
      %p200 = pnand %p198, %p199
      %p201 = pneg %p200
      // Predicated region
      $region33: #{tpu_custom_call.1} parent=5 // pred_check
        _
      $region34: #{tpu_custom_call.1} parent=5 // pred_check_branch
        %203 = sbr.rel (%p200) target = $region36
      $region35: #{tpu_custom_call.1} parent=5 // pred_region
        %s204 = ssub.s32 %s17, 1
        %s205 = sand.u32 %s30, 1
        %s206 = scalar_lea.sflag [#allocation3], %s205
        %s207 = sand.u32 %s30, 1
        %s208 = smul.addr %s207, 8
        %s209 = scalar_lea.vmem [#allocation2], %s208
        // Predicated region
        $region37: #{tpu_custom_call.1} parent=35 // pred_check
          %p210 = pneg %p43
        $region38: #{tpu_custom_call.1} parent=35 // pred_check_branch
          %212 = sbr.rel (%p210) target = $region40
        $region39: #{tpu_custom_call.1} parent=35 // pred_region
          %213 = dma.done %s206, 128
        $region40: #{tpu_custom_call.1} parent=35 // pred_fallthru
          _
        // Predicated region
        $region41: #{tpu_custom_call.1} parent=35 // pred_check
          %p214 = pneg %p64
        $region42: #{tpu_custom_call.1} parent=35 // pred_check_branch
          %216 = sbr.rel (%p214) target = $region44
        $region43: #{tpu_custom_call.1} parent=35 // pred_region
          %217 = dma.done [#allocation6], 512
        $region44: #{tpu_custom_call.1} parent=35 // pred_fallthru
          _
        // Predicated region
        $region45: #{tpu_custom_call.1} parent=35 // pred_check
          %p218 = pneg %p85
        $region46: #{tpu_custom_call.1} parent=35 // pred_check_branch
          %220 = sbr.rel (%p218) target = $region48
        $region47: #{tpu_custom_call.1} parent=35 // pred_region
          %221 = dma.done [#allocation6], 512
        $region48: #{tpu_custom_call.1} parent=35 // pred_fallthru
          _
        %s222 = sand.u32 %s30, 1
        %s223 = scalar_lea.sflag [#allocation3], %s222
        %s224 = sand.u32 %s30, 1
        %s225 = smul.addr %s224, 8
        %s226 = scalar_lea.vmem [#allocation2], %s225
        %p227 = pneg %p43
        %p228 = pneg %p40
        %p229 = pneg %p64
        %p230 = pneg %p61
        %p231 = pneg %p85
        %p232 = pneg %p82
        %p233 = pneg %p106
        %p234 = pneg %p103
        %p235 = pneg %p132
        %p236 = pneg %p129
        %s237 = sand.u32 %s119, 1
        %s238 = scalar_lea.sflag [#allocation4], %s237
        %s239 = sand.u32 %s119, 1
        %s240 = smul.addr %s239, 8
        %s241 = scalar_lea.vmem [#allocation8], %s240
        %v242 = vld [vmem:[%s209] sm:$0xff]
        %v243 = vld [vmem:[#allocation5] sm:$0xff]
        %v244 = vld [vmem:[#allocation5 + $0x8] sm:$0xff]
        %v245 = vld [vmem:[#allocation5 + $0x10] sm:$0xff]
        %v246 = vld [vmem:[#allocation5 + $0x18] sm:$0xff]
        %vm247 = vcmask 261120
        %v249 = vsel %vm247, %v242, 0
        %251 = vmatprep.subr.mxu0 0.0
        %252 = vmatpush1.msra.mxu0 0.0
        %253 = vmatprep.subr.mxu0 0.0
        %254 = vmatpush1.msra.mxu0 0.0
        %255 = vmatprep.subr.mxu0 0.0
        %256 = vmatpush1.msra.mxu0 0.0
        %257 = vmatprep.subr.mxu0 0.0
        %258 = vmatpush1.msra.mxu0 0.0
        %259 = vmatprep.subr.mxu0 0.0
        %260 = vmatpush1.msra.mxu0 0.0
        %261 = vmatprep.subr.mxu0 0.0
        %262 = vmatpush1.msra.mxu0 0.0
        %263 = vmatprep.subr.mxu0 0.0
        %264 = vmatpush1.msra.mxu0 0.0
        %265 = vmatprep.subr.mxu0 0.0
        %266 = vmatpush1.msra.mxu0 0.0
        %267 = vmatprep.subr.mxu0 0.0
        %268 = vmatpush1.msra.mxu0 0.0
        %269 = vmatprep.subr.mxu0 0.0
        %270 = vmatpush1.msra.mxu0 0.0
        %271 = vmatprep.subr.mxu0 0.0
        %272 = vmatpush1.msra.mxu0 0.0
        %273 = vmatprep.subr.mxu0 0.0
        %274 = vmatpush1.msra.mxu0 0.0
        %275 = vmatprep.subr.mxu0 0.0
        %276 = vmatpush1.msra.mxu0 %v246
        %277 = vmatprep.subr.mxu0 0.0
        %278 = vmatpush1.msra.mxu0 %v245
        %279 = vmatprep.subr.mxu0 0.0
        %280 = vmatpush1.msra.mxu0 %v244
        %281 = vmatprep.subr.mxu0 0.0
        %282 = vmatpush1.msra.mxu0 %v243
        %283 = vmatprep.subr.mxu0 0.0
        %284 = vmatpush2.msra.mxu0 0.0
        %285 = vmatprep.subr.mxu0 0.0
        %286 = vmatpush2.msra.mxu0 0.0
        %287 = vmatprep.subr.mxu0 0.0
        %288 = vmatpush2.msra.mxu0 0.0
        %289 = vmatprep.subr.mxu0 0.0
        %290 = vmatpush2.msra.mxu0 0.0
        %291 = vmatprep.subr.mxu0 0.0
        %292 = vmatpush2.msra.mxu0 0.0
        %293 = vmatprep.subr.mxu0 0.0
        %294 = vmatpush2.msra.mxu0 0.0
        %295 = vmatprep.subr.mxu0 0.0
        %296 = vmatpush2.msra.mxu0 0.0
        %297 = vmatprep.subr.mxu0 0.0
        %298 = vmatpush2.msra.mxu0 0.0
        %299 = vmatprep.subr.mxu0 0.0
        %300 = vmatpush2.msra.mxu0 0.0
        %301 = vmatprep.subr.mxu0 0.0
        %302 = vmatpush2.msra.mxu0 0.0
        %303 = vmatprep.subr.mxu0 0.0
        %304 = vmatpush2.msra.mxu0 0.0
        %305 = vmatprep.subr.mxu0 0.0
        %306 = vmatpush2.msra.mxu0 0.0
        %307 = vmatprep.subr.mxu0 0.0
        %308 = vmatpush2.msra.mxu0 0.0
        %309 = vmatprep.subr.mxu0 0.0
        %310 = vmatpush2.msra.mxu0 0.0
        %311 = vmatprep.subr.mxu0 0.0
        %312 = vmatpush2.msra.mxu0 0.0
        %313 = vmatprep.subr.mxu0 0.0
        %314 = vmatpush2.msra.mxu0 0.0
        %315 = vmatprep.mubr.f32.mxu0 0.0
        %316 = vmatmul.mubr.f32.gmra.mxu0 %v249
        %v317 = vpop.f32.mrf.mxu0
        %v318 = vadd.f32 0.0, %v317
        %v319 = vpop.f32.mrf.mxu0
        %320 = vdwg.mxu0
        %322 = vrot.lane.b32.xlu0 %v318, 64
        %v323 = vpop.permute.xlu0 %322
        %324 = vrot.lane.b32.xlu0 %v318, 96
        %v325 = vpop.permute.xlu0 %324
        %vm326 = vcmask 64512
        %v327 = vsel %vm326, %v323, 0
        %v329 = vsel %vm326, %v325, 0
        %331 = vmatprep.subr.mxu0 0.0
        %332 = vmatpush1.xpose.msra.mxu0 0.0
        %333 = vmatprep.subr.mxu0 0.0
        %334 = vmatpush1.xpose.msra.mxu0 0.0
        %335 = vmatprep.subr.mxu0 0.0
        %336 = vmatpush1.xpose.msra.mxu0 0.0
        %337 = vmatprep.subr.mxu0 0.0
        %338 = vmatpush1.xpose.msra.mxu0 0.0
        %339 = vmatprep.subr.mxu0 0.0
        %340 = vmatpush1.xpose.msra.mxu0 0.0
        %341 = vmatprep.subr.mxu0 0.0
        %342 = vmatpush1.xpose.msra.mxu0 0.0
        %343 = vmatprep.subr.mxu0 0.0
        %344 = vmatpush1.xpose.msra.mxu0 0.0
        %345 = vmatprep.subr.mxu0 0.0
        %346 = vmatpush1.xpose.msra.mxu0 0.0
        %347 = vmatprep.subr.mxu0 0.0
        %348 = vmatpush1.xpose.msra.mxu0 0.0
        %349 = vmatprep.subr.mxu0 0.0
        %350 = vmatpush1.xpose.msra.mxu0 0.0
        %351 = vmatprep.subr.mxu0 0.0
        %352 = vmatpush1.xpose.msra.mxu0 0.0
        %353 = vmatprep.subr.mxu0 0.0
        %354 = vmatpush1.xpose.msra.mxu0 0.0
        %355 = vmatprep.subr.mxu0 0.0
        %356 = vmatpush1.xpose.msra.mxu0 0.0
        %357 = vmatprep.subr.mxu0 0.0
        %358 = vmatpush1.xpose.msra.mxu0 0.0
        %359 = vmatprep.subr.mxu0 0.0
        %360 = vmatpush1.xpose.msra.mxu0 0.0
        %361 = vmatprep.subr.mxu0 0.0
        %362 = vmatpush1.xpose.msra.mxu0 %v329
        %363 = vmatprep.subr.mxu0 0.0
        %364 = vmatpush2.xpose.msra.mxu0 0.0
        %365 = vmatprep.subr.mxu0 0.0
        %366 = vmatpush2.xpose.msra.mxu0 0.0
        %367 = vmatprep.subr.mxu0 0.0
        %368 = vmatpush2.xpose.msra.mxu0 0.0
        %369 = vmatprep.subr.mxu0 0.0
        %370 = vmatpush2.xpose.msra.mxu0 0.0
        %371 = vmatprep.subr.mxu0 0.0
        %372 = vmatpush2.xpose.msra.mxu0 0.0
        %373 = vmatprep.subr.mxu0 0.0
        %374 = vmatpush2.xpose.msra.mxu0 0.0
        %375 = vmatprep.subr.mxu0 0.0
        %376 = vmatpush2.xpose.msra.mxu0 0.0
        %377 = vmatprep.subr.mxu0 0.0
        %378 = vmatpush2.xpose.msra.mxu0 0.0
        %379 = vmatprep.subr.mxu0 0.0
        %380 = vmatpush2.xpose.msra.mxu0 0.0
        %381 = vmatprep.subr.mxu0 0.0
        %382 = vmatpush2.xpose.msra.mxu0 0.0
        %383 = vmatprep.subr.mxu0 0.0
        %384 = vmatpush2.xpose.msra.mxu0 0.0
        %385 = vmatprep.subr.mxu0 0.0
        %386 = vmatpush2.xpose.msra.mxu0 0.0
        %387 = vmatprep.subr.mxu0 0.0
        %388 = vmatpush2.xpose.msra.mxu0 0.0
        %389 = vmatprep.subr.mxu0 0.0
        %390 = vmatpush2.xpose.msra.mxu0 0.0
        %391 = vmatprep.subr.mxu0 0.0
        %392 = vmatpush2.xpose.msra.mxu0 0.0
        %393 = vmatprep.subr.mxu0 0.0
        %394 = vmatpush2.xpose.msra.mxu0 0.0
        %395 = vmatprep.mubr.f32.mxu0 0.0
        %396 = vmatmul.mubr.f32.gmra.mxu0 %v327
        %v397 = vpop.f32.mrf.mxu0
        %v398 = vadd.f32 0.0, %v397
        %v399 = vpop.f32.mrf.mxu0
        %400 = vdwg.mxu0
        %v401 = vsel %vm326, %v398, -inf
        %402 = vmax.xlane.f32.xlu0 %v401
        %v403 = vpop.xlane.xlu0 %402
        %v404 = vsub.f32 %v398, %v403
        %v405 = vmul.f32 %v404, 1.442695
        %v406 = vpow.pop %v405
        %v407 = vsel %vm326, %v406, 0.0
        %408 = vadd.xlane.f32.xlu0 %v407
        %v409 = vpop.xlane.xlu0 %408
        %v410 = vrcp.pop %v409
        %v411 = vmul.f32 %v406, %v410
        %v413 = vsel %vm326, %v411, 0
        %415 = vmatprep.subr.mxu0 0.0
        %416 = vmatpush1.msra.mxu0 0.0
        %417 = vmatprep.subr.mxu0 0.0
        %418 = vmatpush1.msra.mxu0 0.0
        %419 = vmatprep.subr.mxu0 0.0
        %420 = vmatpush1.msra.mxu0 0.0
        %421 = vmatprep.subr.mxu0 0.0
        %422 = vmatpush1.msra.mxu0 0.0
        %423 = vmatprep.subr.mxu0 0.0
        %424 = vmatpush1.msra.mxu0 0.0
        %425 = vmatprep.subr.mxu0 0.0
        %426 = vmatpush1.msra.mxu0 0.0
        %427 = vmatprep.subr.mxu0 0.0
        %428 = vmatpush1.msra.mxu0 0.0
        %429 = vmatprep.subr.mxu0 0.0
        %430 = vmatpush1.msra.mxu0 0.0
        %431 = vmatprep.subr.mxu0 0.0
        %432 = vmatpush1.msra.mxu0 0.0
        %433 = vmatprep.subr.mxu0 0.0
        %434 = vmatpush1.msra.mxu0 0.0
        %435 = vmatprep.subr.mxu0 0.0
        %436 = vmatpush1.msra.mxu0 0.0
        %437 = vmatprep.subr.mxu0 0.0
        %438 = vmatpush1.msra.mxu0 0.0
        %439 = vmatprep.subr.mxu0 0.0
        %440 = vmatpush1.msra.mxu0 0.0
        %441 = vmatprep.subr.mxu0 0.0
        %442 = vmatpush1.msra.mxu0 0.0
        %443 = vmatprep.subr.mxu0 0.0
        %444 = vmatpush1.msra.mxu0 0.0
        %445 = vmatprep.subr.mxu0 0.0
        %446 = vmatpush1.msra.mxu0 %v318
        %447 = vmatprep.subr.mxu0 0.0
        %448 = vmatpush2.msra.mxu0 0.0
        %449 = vmatprep.subr.mxu0 0.0
        %450 = vmatpush2.msra.mxu0 0.0
        %451 = vmatprep.subr.mxu0 0.0
        %452 = vmatpush2.msra.mxu0 0.0
        %453 = vmatprep.subr.mxu0 0.0
        %454 = vmatpush2.msra.mxu0 0.0
        %455 = vmatprep.subr.mxu0 0.0
        %456 = vmatpush2.msra.mxu0 0.0
        %457 = vmatprep.subr.mxu0 0.0
        %458 = vmatpush2.msra.mxu0 0.0
        %459 = vmatprep.subr.mxu0 0.0
        %460 = vmatpush2.msra.mxu0 0.0
        %461 = vmatprep.subr.mxu0 0.0
        %462 = vmatpush2.msra.mxu0 0.0
        %463 = vmatprep.subr.mxu0 0.0
        %464 = vmatpush2.msra.mxu0 0.0
        %465 = vmatprep.subr.mxu0 0.0
        %466 = vmatpush2.msra.mxu0 0.0
        %467 = vmatprep.subr.mxu0 0.0
        %468 = vmatpush2.msra.mxu0 0.0
        %469 = vmatprep.subr.mxu0 0.0
        %470 = vmatpush2.msra.mxu0 0.0
        %471 = vmatprep.subr.mxu0 0.0
        %472 = vmatpush2.msra.mxu0 0.0
        %473 = vmatprep.subr.mxu0 0.0
        %474 = vmatpush2.msra.mxu0 0.0
        %475 = vmatprep.subr.mxu0 0.0
        %476 = vmatpush2.msra.mxu0 0.0
        %477 = vmatprep.subr.mxu0 0.0
        %478 = vmatpush2.msra.mxu0 0.0
        %479 = vmatprep.mubr.f32.mxu0 0.0
        %480 = vmatmul.mubr.f32.gmra.mxu0 %v413
        %v481 = vpop.f32.mrf.mxu0
        %v482 = vadd.f32 0.0, %v481
        %v483 = vpop.f32.mrf.mxu0
        %484 = vdwg.mxu0
        %485 = vrot.lane.b32.xlu0 %v318, 56
        %v486 = vpop.permute.xlu0 %485
        %487 = vrot.lane.b32.xlu0 %v318, 88
        %v488 = vpop.permute.xlu0 %487
        %v489 = vsel %vm326, %v486, 0
        %v491 = vsel %vm326, %v488, 0
        %493 = vmatprep.subr.mxu0 0.0
        %494 = vmatpush1.xpose.msra.mxu0 0.0
        %495 = vmatprep.subr.mxu0 0.0
        %496 = vmatpush1.xpose.msra.mxu0 0.0
        %497 = vmatprep.subr.mxu0 0.0
        %498 = vmatpush1.xpose.msra.mxu0 0.0
        %499 = vmatprep.subr.mxu0 0.0
        %500 = vmatpush1.xpose.msra.mxu0 0.0
        %501 = vmatprep.subr.mxu0 0.0
        %502 = vmatpush1.xpose.msra.mxu0 0.0
        %503 = vmatprep.subr.mxu0 0.0
        %504 = vmatpush1.xpose.msra.mxu0 0.0
        %505 = vmatprep.subr.mxu0 0.0
        %506 = vmatpush1.xpose.msra.mxu0 0.0
        %507 = vmatprep.subr.mxu0 0.0
        %508 = vmatpush1.xpose.msra.mxu0 0.0
        %509 = vmatprep.subr.mxu0 0.0
        %510 = vmatpush1.xpose.msra.mxu0 0.0
        %511 = vmatprep.subr.mxu0 0.0
        %512 = vmatpush1.xpose.msra.mxu0 0.0
        %513 = vmatprep.subr.mxu0 0.0
        %514 = vmatpush1.xpose.msra.mxu0 0.0
        %515 = vmatprep.subr.mxu0 0.0
        %516 = vmatpush1.xpose.msra.mxu0 0.0
        %517 = vmatprep.subr.mxu0 0.0
        %518 = vmatpush1.xpose.msra.mxu0 0.0
        %519 = vmatprep.subr.mxu0 0.0
        %520 = vmatpush1.xpose.msra.mxu0 0.0
        %521 = vmatprep.subr.mxu0 0.0
        %522 = vmatpush1.xpose.msra.mxu0 0.0
        %523 = vmatprep.subr.mxu0 0.0
        %524 = vmatpush1.xpose.msra.mxu0 %v491
        %525 = vmatprep.subr.mxu0 0.0
        %526 = vmatpush2.xpose.msra.mxu0 0.0
        %527 = vmatprep.subr.mxu0 0.0
        %528 = vmatpush2.xpose.msra.mxu0 0.0
        %529 = vmatprep.subr.mxu0 0.0
        %530 = vmatpush2.xpose.msra.mxu0 0.0
        %531 = vmatprep.subr.mxu0 0.0
        %532 = vmatpush2.xpose.msra.mxu0 0.0
        %533 = vmatprep.subr.mxu0 0.0
        %534 = vmatpush2.xpose.msra.mxu0 0.0
        %535 = vmatprep.subr.mxu0 0.0
        %536 = vmatpush2.xpose.msra.mxu0 0.0
        %537 = vmatprep.subr.mxu0 0.0
        %538 = vmatpush2.xpose.msra.mxu0 0.0
        %539 = vmatprep.subr.mxu0 0.0
        %540 = vmatpush2.xpose.msra.mxu0 0.0
        %541 = vmatprep.subr.mxu0 0.0
        %542 = vmatpush2.xpose.msra.mxu0 0.0
        %543 = vmatprep.subr.mxu0 0.0
        %544 = vmatpush2.xpose.msra.mxu0 0.0
        %545 = vmatprep.subr.mxu0 0.0
        %546 = vmatpush2.xpose.msra.mxu0 0.0
        %547 = vmatprep.subr.mxu0 0.0
        %548 = vmatpush2.xpose.msra.mxu0 0.0
        %549 = vmatprep.subr.mxu0 0.0
        %550 = vmatpush2.xpose.msra.mxu0 0.0
        %551 = vmatprep.subr.mxu0 0.0
        %552 = vmatpush2.xpose.msra.mxu0 0.0
        %553 = vmatprep.subr.mxu0 0.0
        %554 = vmatpush2.xpose.msra.mxu0 0.0
        %555 = vmatprep.subr.mxu0 0.0
        %556 = vmatpush2.xpose.msra.mxu0 0.0
        %557 = vmatprep.mubr.f32.mxu0 0.0
        %558 = vmatmul.mubr.f32.gmra.mxu0 %v489
        %v559 = vpop.f32.mrf.mxu0
        %v560 = vadd.f32 0.0, %v559
        %v561 = vpop.f32.mrf.mxu0
        %562 = vdwg.mxu0
        %v563 = vsel %vm326, %v560, -inf
        %564 = vmax.xlane.f32.xlu0 %v563
        %v565 = vpop.xlane.xlu0 %564
        %v566 = vsub.f32 %v560, %v565
        %v567 = vmul.f32 %v566, 1.442695
        %v568 = vpow.pop %v567
        %v569 = vsel %vm326, %v568, 0.0
        %570 = vadd.xlane.f32.xlu0 %v569
        %v571 = vpop.xlane.xlu0 %570
        %v572 = vrcp.pop %v571
        %v573 = vmul.f32 %v568, %v572
        %574 = vrot.lane.b32.xlu0 %v318, 120
        %v575 = vpop.permute.xlu0 %574
        %v578 = vsel %vm326, %v573, 0
        %580 = vmatprep.subr.mxu0 0.0
        %581 = vmatpush1.msra.mxu0 0.0
        %582 = vmatprep.subr.mxu0 0.0
        %583 = vmatpush1.msra.mxu0 0.0
        %584 = vmatprep.subr.mxu0 0.0
        %585 = vmatpush1.msra.mxu0 0.0
        %586 = vmatprep.subr.mxu0 0.0
        %587 = vmatpush1.msra.mxu0 0.0
        %588 = vmatprep.subr.mxu0 0.0
        %589 = vmatpush1.msra.mxu0 0.0
        %590 = vmatprep.subr.mxu0 0.0
        %591 = vmatpush1.msra.mxu0 0.0
        %592 = vmatprep.subr.mxu0 0.0
        %593 = vmatpush1.msra.mxu0 0.0
        %594 = vmatprep.subr.mxu0 0.0
        %595 = vmatpush1.msra.mxu0 0.0
        %596 = vmatprep.subr.mxu0 0.0
        %597 = vmatpush1.msra.mxu0 0.0
        %598 = vmatprep.subr.mxu0 0.0
        %599 = vmatpush1.msra.mxu0 0.0
        %600 = vmatprep.subr.mxu0 0.0
        %601 = vmatpush1.msra.mxu0 0.0
        %602 = vmatprep.subr.mxu0 0.0
        %603 = vmatpush1.msra.mxu0 0.0
        %604 = vmatprep.subr.mxu0 0.0
        %605 = vmatpush1.msra.mxu0 0.0
        %606 = vmatprep.subr.mxu0 0.0
        %607 = vmatpush1.msra.mxu0 0.0
        %608 = vmatprep.subr.mxu0 0.0
        %609 = vmatpush1.msra.mxu0 0.0
        %610 = vmatprep.subr.mxu0 0.0
        %611 = vmatpush1.msra.mxu0 %v575
        %612 = vmatprep.subr.mxu0 0.0
        %613 = vmatpush2.msra.mxu0 0.0
        %614 = vmatprep.subr.mxu0 0.0
        %615 = vmatpush2.msra.mxu0 0.0
        %616 = vmatprep.subr.mxu0 0.0
        %617 = vmatpush2.msra.mxu0 0.0
        %618 = vmatprep.subr.mxu0 0.0
        %619 = vmatpush2.msra.mxu0 0.0
        %620 = vmatprep.subr.mxu0 0.0
        %621 = vmatpush2.msra.mxu0 0.0
        %622 = vmatprep.subr.mxu0 0.0
        %623 = vmatpush2.msra.mxu0 0.0
        %624 = vmatprep.subr.mxu0 0.0
        %625 = vmatpush2.msra.mxu0 0.0
        %626 = vmatprep.subr.mxu0 0.0
        %627 = vmatpush2.msra.mxu0 0.0
        %628 = vmatprep.subr.mxu0 0.0
        %629 = vmatpush2.msra.mxu0 0.0
        %630 = vmatprep.subr.mxu0 0.0
        %631 = vmatpush2.msra.mxu0 0.0
        %632 = vmatprep.subr.mxu0 0.0
        %633 = vmatpush2.msra.mxu0 0.0
        %634 = vmatprep.subr.mxu0 0.0
        %635 = vmatpush2.msra.mxu0 0.0
        %636 = vmatprep.subr.mxu0 0.0
        %637 = vmatpush2.msra.mxu0 0.0
        %638 = vmatprep.subr.mxu0 0.0
        %639 = vmatpush2.msra.mxu0 0.0
        %640 = vmatprep.subr.mxu0 0.0
        %641 = vmatpush2.msra.mxu0 0.0
        %642 = vmatprep.subr.mxu0 0.0
        %643 = vmatpush2.msra.mxu0 0.0
        %644 = vmatprep.mubr.f32.mxu0 0.0
        %645 = vmatmul.mubr.f32.gmra.mxu0 %v578
        %v646 = vpop.f32.mrf.mxu0
        %v647 = vadd.f32 0.0, %v646
        %v648 = vpop.f32.mrf.mxu0
        %649 = vdwg.mxu0
        %650 = vrot.lane.b32.xlu0 %v318, 48
        %v651 = vpop.permute.xlu0 %650
        %652 = vrot.lane.b32.xlu0 %v318, 80
        %v653 = vpop.permute.xlu0 %652
        %v654 = vsel %vm326, %v651, 0
        %v656 = vsel %vm326, %v653, 0
        %658 = vmatprep.subr.mxu0 0.0
        %659 = vmatpush1.xpose.msra.mxu0 0.0
        %660 = vmatprep.subr.mxu0 0.0
        %661 = vmatpush1.xpose.msra.mxu0 0.0
        %662 = vmatprep.subr.mxu0 0.0
        %663 = vmatpush1.xpose.msra.mxu0 0.0
        %664 = vmatprep.subr.mxu0 0.0
        %665 = vmatpush1.xpose.msra.mxu0 0.0
        %666 = vmatprep.subr.mxu0 0.0
        %667 = vmatpush1.xpose.msra.mxu0 0.0
        %668 = vmatprep.subr.mxu0 0.0
        %669 = vmatpush1.xpose.msra.mxu0 0.0
        %670 = vmatprep.subr.mxu0 0.0
        %671 = vmatpush1.xpose.msra.mxu0 0.0
        %672 = vmatprep.subr.mxu0 0.0
        %673 = vmatpush1.xpose.msra.mxu0 0.0
        %674 = vmatprep.subr.mxu0 0.0
        %675 = vmatpush1.xpose.msra.mxu0 0.0
        %676 = vmatprep.subr.mxu0 0.0
        %677 = vmatpush1.xpose.msra.mxu0 0.0
        %678 = vmatprep.subr.mxu0 0.0
        %679 = vmatpush1.xpose.msra.mxu0 0.0
        %680 = vmatprep.subr.mxu0 0.0
        %681 = vmatpush1.xpose.msra.mxu0 0.0
        %682 = vmatprep.subr.mxu0 0.0
        %683 = vmatpush1.xpose.msra.mxu0 0.0
        %684 = vmatprep.subr.mxu0 0.0
        %685 = vmatpush1.xpose.msra.mxu0 0.0
        %686 = vmatprep.subr.mxu0 0.0
        %687 = vmatpush1.xpose.msra.mxu0 0.0
        %688 = vmatprep.subr.mxu0 0.0
        %689 = vmatpush1.xpose.msra.mxu0 %v656
        %690 = vmatprep.subr.mxu0 0.0
        %691 = vmatpush2.xpose.msra.mxu0 0.0
        %692 = vmatprep.subr.mxu0 0.0
        %693 = vmatpush2.xpose.msra.mxu0 0.0
        %694 = vmatprep.subr.mxu0 0.0
        %695 = vmatpush2.xpose.msra.mxu0 0.0
        %696 = vmatprep.subr.mxu0 0.0
        %697 = vmatpush2.xpose.msra.mxu0 0.0
        %698 = vmatprep.subr.mxu0 0.0
        %699 = vmatpush2.xpose.msra.mxu0 0.0
        %700 = vmatprep.subr.mxu0 0.0
        %701 = vmatpush2.xpose.msra.mxu0 0.0
        %702 = vmatprep.subr.mxu0 0.0
        %703 = vmatpush2.xpose.msra.mxu0 0.0
        %704 = vmatprep.subr.mxu0 0.0
        %705 = vmatpush2.xpose.msra.mxu0 0.0
        %706 = vmatprep.subr.mxu0 0.0
        %707 = vmatpush2.xpose.msra.mxu0 0.0
        %708 = vmatprep.subr.mxu0 0.0
        %709 = vmatpush2.xpose.msra.mxu0 0.0
        %710 = vmatprep.subr.mxu0 0.0
        %711 = vmatpush2.xpose.msra.mxu0 0.0
        %712 = vmatprep.subr.mxu0 0.0
        %713 = vmatpush2.xpose.msra.mxu0 0.0
        %714 = vmatprep.subr.mxu0 0.0
        %715 = vmatpush2.xpose.msra.mxu0 0.0
        %716 = vmatprep.subr.mxu0 0.0
        %717 = vmatpush2.xpose.msra.mxu0 0.0
        %718 = vmatprep.subr.mxu0 0.0
        %719 = vmatpush2.xpose.msra.mxu0 0.0
        %720 = vmatprep.subr.mxu0 0.0
        %721 = vmatpush2.xpose.msra.mxu0 0.0
        %722 = vmatprep.mubr.f32.mxu0 0.0
        %723 = vmatmul.mubr.f32.gmra.mxu0 %v654
        %v724 = vpop.f32.mrf.mxu0
        %v725 = vadd.f32 0.0, %v724
        %v726 = vpop.f32.mrf.mxu0
        %727 = vdwg.mxu0
        %v728 = vsel %vm326, %v725, -inf
        %729 = vmax.xlane.f32.xlu0 %v728
        %v730 = vpop.xlane.xlu0 %729
        %v731 = vsub.f32 %v725, %v730
        %v732 = vmul.f32 %v731, 1.442695
        %v733 = vpow.pop %v732
        %v734 = vsel %vm326, %v733, 0.0
        %735 = vadd.xlane.f32.xlu0 %v734
        %v736 = vpop.xlane.xlu0 %735
        %v737 = vrcp.pop %v736
        %v738 = vmul.f32 %v733, %v737
        %739 = vrot.lane.b32.xlu0 %v318, 112
        %v740 = vpop.permute.xlu0 %739
        %v743 = vsel %vm326, %v738, 0
        %745 = vmatprep.subr.mxu0 0.0
        %746 = vmatpush1.msra.mxu0 0.0
        %747 = vmatprep.subr.mxu0 0.0
        %748 = vmatpush1.msra.mxu0 0.0
        %749 = vmatprep.subr.mxu0 0.0
        %750 = vmatpush1.msra.mxu0 0.0
        %751 = vmatprep.subr.mxu0 0.0
        %752 = vmatpush1.msra.mxu0 0.0
        %753 = vmatprep.subr.mxu0 0.0
        %754 = vmatpush1.msra.mxu0 0.0
        %755 = vmatprep.subr.mxu0 0.0
        %756 = vmatpush1.msra.mxu0 0.0
        %757 = vmatprep.subr.mxu0 0.0
        %758 = vmatpush1.msra.mxu0 0.0
        %759 = vmatprep.subr.mxu0 0.0
        %760 = vmatpush1.msra.mxu0 0.0
        %761 = vmatprep.subr.mxu0 0.0
        %762 = vmatpush1.msra.mxu0 0.0
        %763 = vmatprep.subr.mxu0 0.0
        %764 = vmatpush1.msra.mxu0 0.0
        %765 = vmatprep.subr.mxu0 0.0
        %766 = vmatpush1.msra.mxu0 0.0
        %767 = vmatprep.subr.mxu0 0.0
        %768 = vmatpush1.msra.mxu0 0.0
        %769 = vmatprep.subr.mxu0 0.0
        %770 = vmatpush1.msra.mxu0 0.0
        %771 = vmatprep.subr.mxu0 0.0
        %772 = vmatpush1.msra.mxu0 0.0
        %773 = vmatprep.subr.mxu0 0.0
        %774 = vmatpush1.msra.mxu0 0.0
        %775 = vmatprep.subr.mxu0 0.0
        %776 = vmatpush1.msra.mxu0 %v740
        %777 = vmatprep.subr.mxu0 0.0
        %778 = vmatpush2.msra.mxu0 0.0
        %779 = vmatprep.subr.mxu0 0.0
        %780 = vmatpush2.msra.mxu0 0.0
        %781 = vmatprep.subr.mxu0 0.0
        %782 = vmatpush2.msra.mxu0 0.0
        %783 = vmatprep.subr.mxu0 0.0
        %784 = vmatpush2.msra.mxu0 0.0
        %785 = vmatprep.subr.mxu0 0.0
        %786 = vmatpush2.msra.mxu0 0.0
        %787 = vmatprep.subr.mxu0 0.0
        %788 = vmatpush2.msra.mxu0 0.0
        %789 = vmatprep.subr.mxu0 0.0
        %790 = vmatpush2.msra.mxu0 0.0
        %791 = vmatprep.subr.mxu0 0.0
        %792 = vmatpush2.msra.mxu0 0.0
        %793 = vmatprep.subr.mxu0 0.0
        %794 = vmatpush2.msra.mxu0 0.0
        %795 = vmatprep.subr.mxu0 0.0
        %796 = vmatpush2.msra.mxu0 0.0
        %797 = vmatprep.subr.mxu0 0.0
        %798 = vmatpush2.msra.mxu0 0.0
        %799 = vmatprep.subr.mxu0 0.0
        %800 = vmatpush2.msra.mxu0 0.0
        %801 = vmatprep.subr.mxu0 0.0
        %802 = vmatpush2.msra.mxu0 0.0
        %803 = vmatprep.subr.mxu0 0.0
        %804 = vmatpush2.msra.mxu0 0.0
        %805 = vmatprep.subr.mxu0 0.0
        %806 = vmatpush2.msra.mxu0 0.0
        %807 = vmatprep.subr.mxu0 0.0
        %808 = vmatpush2.msra.mxu0 0.0
        %809 = vmatprep.mubr.f32.mxu0 0.0
        %810 = vmatmul.mubr.f32.gmra.mxu0 %v743
        %v811 = vpop.f32.mrf.mxu0
        %v812 = vadd.f32 0.0, %v811
        %v813 = vpop.f32.mrf.mxu0
        %814 = vdwg.mxu0
        %815 = vrot.lane.b32.xlu0 %v318, 40
        %v816 = vpop.permute.xlu0 %815
        %817 = vrot.lane.b32.xlu0 %v318, 72
        %v818 = vpop.permute.xlu0 %817
        %v819 = vsel %vm326, %v816, 0
        %v821 = vsel %vm326, %v818, 0
        %823 = vmatprep.subr.mxu0 0.0
        %824 = vmatpush1.xpose.msra.mxu0 0.0
        %825 = vmatprep.subr.mxu0 0.0
        %826 = vmatpush1.xpose.msra.mxu0 0.0
        %827 = vmatprep.subr.mxu0 0.0
        %828 = vmatpush1.xpose.msra.mxu0 0.0
        %829 = vmatprep.subr.mxu0 0.0
        %830 = vmatpush1.xpose.msra.mxu0 0.0
        %831 = vmatprep.subr.mxu0 0.0
        %832 = vmatpush1.xpose.msra.mxu0 0.0
        %833 = vmatprep.subr.mxu0 0.0
        %834 = vmatpush1.xpose.msra.mxu0 0.0
        %835 = vmatprep.subr.mxu0 0.0
        %836 = vmatpush1.xpose.msra.mxu0 0.0
        %837 = vmatprep.subr.mxu0 0.0
        %838 = vmatpush1.xpose.msra.mxu0 0.0
        %839 = vmatprep.subr.mxu0 0.0
        %840 = vmatpush1.xpose.msra.mxu0 0.0
        %841 = vmatprep.subr.mxu0 0.0
        %842 = vmatpush1.xpose.msra.mxu0 0.0
        %843 = vmatprep.subr.mxu0 0.0
        %844 = vmatpush1.xpose.msra.mxu0 0.0
        %845 = vmatprep.subr.mxu0 0.0
        %846 = vmatpush1.xpose.msra.mxu0 0.0
        %847 = vmatprep.subr.mxu0 0.0
        %848 = vmatpush1.xpose.msra.mxu0 0.0
        %849 = vmatprep.subr.mxu0 0.0
        %850 = vmatpush1.xpose.msra.mxu0 0.0
        %851 = vmatprep.subr.mxu0 0.0
        %852 = vmatpush1.xpose.msra.mxu0 0.0
        %853 = vmatprep.subr.mxu0 0.0
        %854 = vmatpush1.xpose.msra.mxu0 %v821
        %855 = vmatprep.subr.mxu0 0.0
        %856 = vmatpush2.xpose.msra.mxu0 0.0
        %857 = vmatprep.subr.mxu0 0.0
        %858 = vmatpush2.xpose.msra.mxu0 0.0
        %859 = vmatprep.subr.mxu0 0.0
        %860 = vmatpush2.xpose.msra.mxu0 0.0
        %861 = vmatprep.subr.mxu0 0.0
        %862 = vmatpush2.xpose.msra.mxu0 0.0
        %863 = vmatprep.subr.mxu0 0.0
        %864 = vmatpush2.xpose.msra.mxu0 0.0
        %865 = vmatprep.subr.mxu0 0.0
        %866 = vmatpush2.xpose.msra.mxu0 0.0
        %867 = vmatprep.subr.mxu0 0.0
        %868 = vmatpush2.xpose.msra.mxu0 0.0
        %869 = vmatprep.subr.mxu0 0.0
        %870 = vmatpush2.xpose.msra.mxu0 0.0
        %871 = vmatprep.subr.mxu0 0.0
        %872 = vmatpush2.xpose.msra.mxu0 0.0
        %873 = vmatprep.subr.mxu0 0.0
        %874 = vmatpush2.xpose.msra.mxu0 0.0
        %875 = vmatprep.subr.mxu0 0.0
        %876 = vmatpush2.xpose.msra.mxu0 0.0
        %877 = vmatprep.subr.mxu0 0.0
        %878 = vmatpush2.xpose.msra.mxu0 0.0
        %879 = vmatprep.subr.mxu0 0.0
        %880 = vmatpush2.xpose.msra.mxu0 0.0
        %881 = vmatprep.subr.mxu0 0.0
        %882 = vmatpush2.xpose.msra.mxu0 0.0
        %883 = vmatprep.subr.mxu0 0.0
        %884 = vmatpush2.xpose.msra.mxu0 0.0
        %885 = vmatprep.subr.mxu0 0.0
        %886 = vmatpush2.xpose.msra.mxu0 0.0
        %887 = vmatprep.mubr.f32.mxu0 0.0
        %888 = vmatmul.mubr.f32.gmra.mxu0 %v819
        %v889 = vpop.f32.mrf.mxu0
        %v890 = vadd.f32 0.0, %v889
        %v891 = vpop.f32.mrf.mxu0
        %892 = vdwg.mxu0
        %v893 = vsel %vm326, %v890, -inf
        %894 = vmax.xlane.f32.xlu0 %v893
        %v895 = vpop.xlane.xlu0 %894
        %v896 = vsub.f32 %v890, %v895
        %v897 = vmul.f32 %v896, 1.442695
        %v898 = vpow.pop %v897
        %v899 = vsel %vm326, %v898, 0.0
        %900 = vadd.xlane.f32.xlu0 %v899
        %v901 = vpop.xlane.xlu0 %900
        %v902 = vrcp.pop %v901
        %v903 = vmul.f32 %v898, %v902
        %904 = vrot.lane.b32.xlu0 %v318, 104
        %v905 = vpop.permute.xlu0 %904
        %v908 = vsel %vm326, %v903, 0
        %910 = vmatprep.subr.mxu0 0.0
        %911 = vmatpush1.msra.mxu0 0.0
        %912 = vmatprep.subr.mxu0 0.0
        %913 = vmatpush1.msra.mxu0 0.0
        %914 = vmatprep.subr.mxu0 0.0
        %915 = vmatpush1.msra.mxu0 0.0
        %916 = vmatprep.subr.mxu0 0.0
        %917 = vmatpush1.msra.mxu0 0.0
        %918 = vmatprep.subr.mxu0 0.0
        %919 = vmatpush1.msra.mxu0 0.0
        %920 = vmatprep.subr.mxu0 0.0
        %921 = vmatpush1.msra.mxu0 0.0
        %922 = vmatprep.subr.mxu0 0.0
        %923 = vmatpush1.msra.mxu0 0.0
        %924 = vmatprep.subr.mxu0 0.0
        %925 = vmatpush1.msra.mxu0 0.0
        %926 = vmatprep.subr.mxu0 0.0
        %927 = vmatpush1.msra.mxu0 0.0
        %928 = vmatprep.subr.mxu0 0.0
        %929 = vmatpush1.msra.mxu0 0.0
        %930 = vmatprep.subr.mxu0 0.0
        %931 = vmatpush1.msra.mxu0 0.0
        %932 = vmatprep.subr.mxu0 0.0
        %933 = vmatpush1.msra.mxu0 0.0
        %934 = vmatprep.subr.mxu0 0.0
        %935 = vmatpush1.msra.mxu0 0.0
        %936 = vmatprep.subr.mxu0 0.0
        %937 = vmatpush1.msra.mxu0 0.0
        %938 = vmatprep.subr.mxu0 0.0
        %939 = vmatpush1.msra.mxu0 0.0
        %940 = vmatprep.subr.mxu0 0.0
        %941 = vmatpush1.msra.mxu0 %v905
        %942 = vmatprep.subr.mxu0 0.0
        %943 = vmatpush2.msra.mxu0 0.0
        %944 = vmatprep.subr.mxu0 0.0
        %945 = vmatpush2.msra.mxu0 0.0
        %946 = vmatprep.subr.mxu0 0.0
        %947 = vmatpush2.msra.mxu0 0.0
        %948 = vmatprep.subr.mxu0 0.0
        %949 = vmatpush2.msra.mxu0 0.0
        %950 = vmatprep.subr.mxu0 0.0
        %951 = vmatpush2.msra.mxu0 0.0
        %952 = vmatprep.subr.mxu0 0.0
        %953 = vmatpush2.msra.mxu0 0.0
        %954 = vmatprep.subr.mxu0 0.0
        %955 = vmatpush2.msra.mxu0 0.0
        %956 = vmatprep.subr.mxu0 0.0
        %957 = vmatpush2.msra.mxu0 0.0
        %958 = vmatprep.subr.mxu0 0.0
        %959 = vmatpush2.msra.mxu0 0.0
        %960 = vmatprep.subr.mxu0 0.0
        %961 = vmatpush2.msra.mxu0 0.0
        %962 = vmatprep.subr.mxu0 0.0
        %963 = vmatpush2.msra.mxu0 0.0
        %964 = vmatprep.subr.mxu0 0.0
        %965 = vmatpush2.msra.mxu0 0.0
        %966 = vmatprep.subr.mxu0 0.0
        %967 = vmatpush2.msra.mxu0 0.0
        %968 = vmatprep.subr.mxu0 0.0
        %969 = vmatpush2.msra.mxu0 0.0
        %970 = vmatprep.subr.mxu0 0.0
        %971 = vmatpush2.msra.mxu0 0.0
        %972 = vmatprep.subr.mxu0 0.0
        %973 = vmatpush2.msra.mxu0 0.0
        %974 = vmatprep.mubr.f32.mxu0 0.0
        %975 = vmatmul.mubr.f32.gmra.mxu0 %v908
        %v976 = vpop.f32.mrf.mxu0
        %v977 = vadd.f32 0.0, %v976
        %v978 = vpop.f32.mrf.mxu0
        %979 = vdwg.mxu0
        %981 = vrot.lane.b32.xlu0 %v647, 8
        %v982 = vpop.permute.xlu0 %981
        %985 = vrot.lane.b32.xlu0 %v812, 16
        %v986 = vpop.permute.xlu0 %985
        %989 = vrot.lane.b32.xlu0 %v977, 24
        %v990 = vpop.permute.xlu0 %989
        %v992 = vsel %vm326, %v482, %v982
        %vm993 = vcmask 130048
        %v994 = vsel %vm993, %v992, %v986
        %vm995 = vcmask 195584
        %v996 = vsel %vm995, %v994, %v990
        %v997 = vld [vmem:[#allocation7] sm:$0xff]
        %v998 = vld [vmem:[#allocation7 + $0x8] sm:$0xff]
        %v999 = vld [vmem:[#allocation7 + $0x10] sm:$0xff]
        %v1000 = vld [vmem:[#allocation7 + $0x18] sm:$0xff]
        %v1001 = vld [vmem:[%s3] sm:$0x1]
        %v1003 = vlaneseq
        %v1004 = vshrl.u32 %v1003, 7
        %v1005 = vsub.s32 0, %v1004
        %v1006 = vrot.slane %v1001, %v1005
        %v1009 = vsel %vm247, %v996, 0
        %1011 = vmatprep.subr.mxu0 0.0
        %1012 = vmatpush1.msra.mxu0 0.0
        %1013 = vmatprep.subr.mxu0 0.0
        %1014 = vmatpush1.msra.mxu0 0.0
        %1015 = vmatprep.subr.mxu0 0.0
        %1016 = vmatpush1.msra.mxu0 0.0
        %1017 = vmatprep.subr.mxu0 0.0
        %1018 = vmatpush1.msra.mxu0 0.0
        %1019 = vmatprep.subr.mxu0 0.0
        %1020 = vmatpush1.msra.mxu0 0.0
        %1021 = vmatprep.subr.mxu0 0.0
        %1022 = vmatpush1.msra.mxu0 0.0
        %1023 = vmatprep.subr.mxu0 0.0
        %1024 = vmatpush1.msra.mxu0 0.0
        %1025 = vmatprep.subr.mxu0 0.0
        %1026 = vmatpush1.msra.mxu0 0.0
        %1027 = vmatprep.subr.mxu0 0.0
        %1028 = vmatpush1.msra.mxu0 0.0
        %1029 = vmatprep.subr.mxu0 0.0
        %1030 = vmatpush1.msra.mxu0 0.0
        %1031 = vmatprep.subr.mxu0 0.0
        %1032 = vmatpush1.msra.mxu0 0.0
        %1033 = vmatprep.subr.mxu0 0.0
        %1034 = vmatpush1.msra.mxu0 0.0
        %1035 = vmatprep.subr.mxu0 0.0
        %1036 = vmatpush1.msra.mxu0 %v1000
        %1037 = vmatprep.subr.mxu0 0.0
        %1038 = vmatpush1.msra.mxu0 %v999
        %1039 = vmatprep.subr.mxu0 0.0
        %1040 = vmatpush1.msra.mxu0 %v998
        %1041 = vmatprep.subr.mxu0 0.0
        %1042 = vmatpush1.msra.mxu0 %v997
        %1043 = vmatprep.subr.mxu0 0.0
        %1044 = vmatpush2.msra.mxu0 0.0
        %1045 = vmatprep.subr.mxu0 0.0
        %1046 = vmatpush2.msra.mxu0 0.0
        %1047 = vmatprep.subr.mxu0 0.0
        %1048 = vmatpush2.msra.mxu0 0.0
        %1049 = vmatprep.subr.mxu0 0.0
        %1050 = vmatpush2.msra.mxu0 0.0
        %1051 = vmatprep.subr.mxu0 0.0
        %1052 = vmatpush2.msra.mxu0 0.0
        %1053 = vmatprep.subr.mxu0 0.0
        %1054 = vmatpush2.msra.mxu0 0.0
        %1055 = vmatprep.subr.mxu0 0.0
        %1056 = vmatpush2.msra.mxu0 0.0
        %1057 = vmatprep.subr.mxu0 0.0
        %1058 = vmatpush2.msra.mxu0 0.0
        %1059 = vmatprep.subr.mxu0 0.0
        %1060 = vmatpush2.msra.mxu0 0.0
        %1061 = vmatprep.subr.mxu0 0.0
        %1062 = vmatpush2.msra.mxu0 0.0
        %1063 = vmatprep.subr.mxu0 0.0
        %1064 = vmatpush2.msra.mxu0 0.0
        %1065 = vmatprep.subr.mxu0 0.0
        %1066 = vmatpush2.msra.mxu0 0.0
        %1067 = vmatprep.subr.mxu0 0.0
        %1068 = vmatpush2.msra.mxu0 0.0
        %1069 = vmatprep.subr.mxu0 0.0
        %1070 = vmatpush2.msra.mxu0 0.0
        %1071 = vmatprep.subr.mxu0 0.0
        %1072 = vmatpush2.msra.mxu0 0.0
        %1073 = vmatprep.subr.mxu0 0.0
        %1074 = vmatpush2.msra.mxu0 0.0
        %1075 = vmatprep.mubr.f32.mxu0 0.0
        %1076 = vmatmul.mubr.f32.gmra.mxu0 %v1009
        %v1077 = vpop.f32.mrf.mxu0
        %v1078 = vadd.f32 %v1006, %v1077
        %v1079 = vpop.f32.mrf.mxu0
        %1080 = vdwg.mxu0
        %1081 = vst.msk [vmem:[%s241] sm:$0xff] %vm247, %v1078
        %s1082 = sand.u32 %s119, 1
        %s1083 = scalar_lea.sflag [#allocation4], %s1082
        %s1084 = sand.u32 %s119, 1
        %s1085 = smul.addr %s1084, 8
        %s1086 = scalar_lea.vmem [#allocation8], %s1085
        // Predicated region
        $region49: #{tpu_custom_call.1} parent=35 // pred_check
          %p1087 = pneg %p129
        $region50: #{tpu_custom_call.1} parent=35 // pred_check_branch
          %1089 = sbr.rel (%p1087) target = $region52
        $region51: #{tpu_custom_call.1} parent=35 // pred_region
          %s1091 = ssub.s32 128, 128
          %1092 = vsyncadd %s1083, %s1091
          %s1093 = smul.addr %s22, 128
          %s1094 = scalar_lea.hbm %s4, %s1093
          %s1096 = sshll.u32 %s1086, 4
          %s1097 = int_to_ptr.vmem [resolvable:$true] %s1096
          %1099 = dma.vmem_to_hbm [thread:$0]  %s1097, 128, %s1094, %s1083
        $region52: #{tpu_custom_call.1} parent=35 // pred_fallthru
          _
      $region36: #{tpu_custom_call.1} parent=5 // pred_fallthru
        _
      %p1100 = scmp.le.s32.totalorder 2, %s17
      // Predicated region
      $region53: #{tpu_custom_call.1} parent=5 // pred_check
        %p1101 = pneg %p1100
      $region54: #{tpu_custom_call.1} parent=5 // pred_check_branch
        %1103 = sbr.rel (%p1101) target = $region56
      $region55: #{tpu_custom_call.1} parent=5 // pred_region
        %s1104 = ssub.s32 %s17, 2
        // Predicated region
        $region57: #{tpu_custom_call.1} parent=55 // pred_check
          %p1105 = pneg %p135
        $region58: #{tpu_custom_call.1} parent=55 // pred_check_branch
          %1107 = sbr.rel (%p1105) target = $region60
        $region59: #{tpu_custom_call.1} parent=55 // pred_region
          %s1108 = sand.u32 %s120, 1
          %s1109 = scalar_lea.sflag [#allocation4], %s1108
          %s1110 = sand.u32 %s120, 1
          %s1111 = smul.addr %s1110, 8
          %s1112 = scalar_lea.vmem [#allocation8], %s1111
          %1113 = dma.done %s1109, 128
        $region60: #{tpu_custom_call.1} parent=55 // pred_fallthru
          _
      $region56: #{tpu_custom_call.1} parent=5 // pred_fallthru
        _
    $region6: #{tpu_custom_call.1} parent=1 // loop_footer
      %s21 = sadd.s32 1, %s17
    $region7: #{tpu_custom_call.1} parent=1 // loop_footer_branch
      %16 = sbr.rel target = $region3
    $region8: #{tpu_custom_call.1} parent=1 // loop_exit
      _
    %1114 = vsyncpa [#allocation3], 1
    %s1115 = scalar_lea.sflag [#allocation3], 1
    %1116 = vsyncpa %s1115, 1
    %1117 = vsyncpa [#allocation6], 1
    %1118 = vsyncpa [#allocation4], 1
    %s1119 = scalar_lea.sflag [#allocation4], 1
    %1120 = vsyncpa %s1119, 1

</llo_original>
